<compile_context>
chip_gen: v7x
topology: tpu7x:2x2x1
jax: 0.10.0
libtpu: 0.0.40
codegen_flags: <defaults>
</compile_context>

<pallas_src>
import jax
import jax.numpy as jnp
from jax.experimental import pallas as pl
from jax.experimental.pallas import tpu as pltpu


# --------------------------------------------------------------------------- #
# Kernel
# --------------------------------------------------------------------------- #
def attentive_kernel(x_ref, w_ref, beff_ref, wd_ref, bd_ref, o_ref):
    """One batch tile (TB rows) per grid step.

    x_ref   : (TB, L*Din)   lane-dense flattened input rows
    w_ref   : (L*Din, H)    fused affine weight (constant across steps)
    beff_ref: (1, H)        fused bias
    wd_ref  : (1, H)        dense-head weight (row vector)
    bd_ref  : (1, 1)        dense-head bias
    o_ref   : (1, 1, TB)    lane-dense output row for this tile
    """
    # mean_t conv2(conv1(x))[t]  ==  x_flat @ W_big + b_eff  -> one MXU pass.
    m = jnp.dot(x_ref[...], w_ref[...],
                preferred_element_type=jnp.float32) + beff_ref[...]
    m = jnp.maximum(m, 0.0)                                  # relu, (TB, H)

    # Dense head directly as a lane-dense (1, TB) row:
    #   logit[0, b] = sum_h wd[0, h] * m[b, h]   (A @ B^T on the MXU),
    # avoiding a (TB, 1) masked-store column and a sublane reduction.
    logit = jnp.einsum("oh,bh->ob", wd_ref[...], m,
                       preferred_element_type=jnp.float32) + bd_ref[...]
    o_ref[...] = jax.nn.sigmoid(logit)[None].astype(o_ref.dtype)  # (1,1,TB)


# --------------------------------------------------------------------------- #
# One-time parameter fold (hoisted out of the per-call path)
# --------------------------------------------------------------------------- #
def prepare_attentive_params(params, seq_len):
    """Fold (conv1, conv2, sequence-mean) into one affine map. Call once."""
    w1, b1, w2, b2, wd, bd = params
    L = seq_len
    din, _ = w1.shape
    inv_l = 1.0 / L
    w2sum = w2[0] + w2[1] + w2[2]                    # (H, H)
    a = (w1 @ w2sum) * inv_l                         # multiplies every x[t]
    bm = -(w1 @ w2[0]) * inv_l                       # correction for x[L-1]
    cm = -(w1 @ w2[2]) * inv_l                       # correction for x[0]
    b_eff = b1 @ w2sum - (b1 @ (w2[0] + w2[2])) * inv_l + b2   # (1, H)
    w_big = jnp.tile(a, (L, 1))                      # (L*Din, H)
    w_big = w_big.at[:din].add(cm)
    w_big = w_big.at[(L - 1) * din:].add(bm)
    return w_big, b_eff, wd, bd


def _choose_batch_tile(batch, max_tile=256):
    """Batch tile: >=2 grid steps when the batch permits (v7x: one per TC,
    plus DMA/compute overlap), multiple of 8 sublanes, dividing B when
    feasible so the last block is full."""
    if batch <= 8:
        return batch                      # one tiny tile (block == full array)
    if batch <= 2 * max_tile:
        half = batch // 2
        if batch % 2 == 0 and half % 8 == 0:
            return half                   # exactly 2 full tiles
        return batch if batch <= max_tile else max_tile
    for tile in (max_tile, 128, 64):
        if batch % tile == 0:
            return tile
    return max_tile                       # partial last block; tail dropped


# --------------------------------------------------------------------------- #
# Forward wrapper
# --------------------------------------------------------------------------- #
def attentive_forward(x, fused_params, *, max_batch_tile=256):
    """x: (B, L, Din) float32 -> (B,) float32 (matches torch .squeeze(), B>1)."""
    w_big, b_eff, wd, bd = fused_params
    B, L, Din = x.shape
    K = L * Din
    H = w_big.shape[1]
    assert w_big.shape[0] == K, "fused params prepared for a different seq_len"

    TB = _choose_batch_tile(B, max_batch_tile)
    G = pl.cdiv(B, TB)

    # Free, contiguous reshape: lane-dense (TB, L*Din) DMA blocks.
    x_flat = x.reshape(B, K)

    out = pl.pallas_call(
        attentive_kernel,
        out_shape=jax.ShapeDtypeStruct((G, 1, TB), jnp.float32),
        grid=(G,),
        in_specs=[
            pl.BlockSpec((TB, K), lambda i: (i, 0)),   # x tile (lane-dense)
            pl.BlockSpec((K, H), lambda i: (0, 0)),    # fused weight (resident)
            pl.BlockSpec((1, H), lambda i: (0, 0)),    # fused bias
            pl.BlockSpec((1, H), lambda i: (0, 0)),    # dense weight row
            pl.BlockSpec((1, 1), lambda i: (0, 0)),    # dense bias
        ],
        out_specs=pl.BlockSpec((1, 1, TB), lambda i: (i, 0, 0)),  # lane-dense
        compiler_params=pltpu.CompilerParams(
            dimension_semantics=("parallel",)),
        cost_estimate=pl.CostEstimate(
            flops=2 * B * K * H + 2 * B * H,
            transcendentals=B,
            bytes_accessed=4 * (B * K + K * H + 2 * H + B + 1)),
    )(x_flat, w_big, b_eff, wd, bd)

    # Tail rows of a partial last block hold unspecified data; dropped here.
    # TODO(synk): torch .squeeze() returns a 0-d scalar when B == 1; we return
    # shape (1,) in that case (API-shape only; values identical).
    return out.reshape(-1)[:B]


# --------------------------------------------------------------------------- #
# PyTorch-like init and pure-JAX reference (per-timestep convs)
# --------------------------------------------------------------------------- #
def init_params(key, input_size, hidden_size):
    """Deterministic PyTorch-like (uniform +/- 1/sqrt(fan_in)) init."""
    ks = jax.random.split(key, 6)

    def u(k, shape, fan_in):
        bound = 1.0 / jnp.sqrt(fan_in)
        return jax.random.uniform(k, shape, jnp.float32, -bound, bound)

    # Conv1d(input_size, hidden, k=1): torch weight (H, Din, 1) -> (Din, H)
    w1 = u(ks[0], (input_size, hidden_size), input_size * 1)
    b1 = u(ks[1], (1, hidden_size), input_size * 1)
    # Conv1d(hidden, hidden, k=3): torch weight (H, H, 3) -> (3, H_in, H_out)
    w2 = u(ks[2], (3, hidden_size, hidden_size), hidden_size * 3)
    b2 = u(ks[3], (1, hidden_size), hidden_size * 3)
    # Linear(hidden, 1): torch weight (1, H) kept as a (1, H) row vector
    wd = u(ks[4], (1, hidden_size), hidden_size)
    bd = u(ks[5], (1, 1), hidden_size)
    return (w1, b1, w2, b2, wd, bd)


def reference(x, params):
    """Pure-JAX reference of the PyTorch forward pass (per-timestep convs)."""
    w1, b1, w2, b2, wd, bd = params
    L = x.shape[1]
    x1 = jnp.einsum("bld,dh->blh", x, w1) + b1               # conv1 (k=1)
    xp = jnp.pad(x1, ((0, 0), (1, 1), (0, 0)))               # pad=1
    y = (jnp.einsum("blh,hk->blk", xp[:, :L], w2[0])
         + jnp.einsum("blh,hk->blk", xp[:, 1:L + 1], w2[1])
         + jnp.einsum("blh,hk->blk", xp[:, 2:L + 2], w2[2]) + b2)
    m = jnp.maximum(jnp.mean(y, axis=1), 0.0)                # mean over seq, relu
    logit = jnp.sum(m * wd, axis=-1, keepdims=True) + bd
    return jnp.squeeze(jax.nn.sigmoid(logit), axis=-1)


if __name__ == "__main__":
    B, L, INPUT_SIZE, HIDDEN_SIZE = 2, 8, 4, 32

    key = jax.random.PRNGKey(0)
    k_x, k_p = jax.random.split(key)
    x = jax.random.normal(k_x, (B, L, INPUT_SIZE), jnp.float32)
    params = init_params(k_p, INPUT_SIZE, HIDDEN_SIZE)

    fused = prepare_attentive_params(params, seq_len=L)      # one-time prep
    out = jax.block_until_ready(attentive_forward(x, fused))
    ref = jax.block_until_ready(reference(x, params))

    assert out.shape == (B,), f"bad output shape {out.shape}"
    assert jnp.allclose(out, ref, atol=1e-5, rtol=1e-5), (out, ref)
    print("KERNEL_OK")
</pallas_src>

<mosaic_0001>
module attributes {stable_mosaic.version = 11 : i64} {
  func.func @attentive_kernel(%arg0: i32, %arg1: memref<2x32xf32, #tpu.memory_space<vmem>>, %arg2: memref<32x32xf32, #tpu.memory_space<vmem>>, %arg3: memref<1x32xf32, #tpu.memory_space<vmem>>, %arg4: memref<1x32xf32, #tpu.memory_space<vmem>>, %arg5: memref<1x1xf32, #tpu.memory_space<vmem>>, %arg6: memref<1x1x2xf32, #tpu.memory_space<vmem>>) attributes {dimension_semantics = [#tpu.dimension_semantics<parallel>], iteration_bounds = array<i64: 1>, scalar_prefetch = 0 : i64, scratch_operands = 0 : i64, tpu.core_type = #tpu.core_type<tc>, window_params = [{transform_indices = @transform_0, window_bounds = array<i64: 2, 32>}, {pipeline_mode = #tpu.pipeline_mode<synchronous>, transform_indices = @transform_1, window_bounds = array<i64: 32, 32>}, {pipeline_mode = #tpu.pipeline_mode<synchronous>, transform_indices = @transform_2, window_bounds = array<i64: 1, 32>}, {pipeline_mode = #tpu.pipeline_mode<synchronous>, transform_indices = @transform_3, window_bounds = array<i64: 1, 32>}, {pipeline_mode = #tpu.pipeline_mode<synchronous>, transform_indices = @transform_4, window_bounds = array<i64: 1, 1>}, {transform_indices = @transform_5, window_bounds = array<i64: 1, 1, 2>}]} {
    %c0 = arith.constant 0 : index
    %c0_0 = arith.constant 0 : index
    %0 = vector.load %arg1[%c0, %c0_0] : memref<2x32xf32, #tpu.memory_space<vmem>>, vector<2x32xf32>
    %c0_1 = arith.constant 0 : index
    %c0_2 = arith.constant 0 : index
    %1 = vector.load %arg2[%c0_1, %c0_2] : memref<32x32xf32, #tpu.memory_space<vmem>>, vector<32x32xf32>
    %cst = arith.constant dense<0.000000e+00> : vector<2x32xf32>
    %2 = tpu.matmul %0, %1, %cst {dimension_numbers = #tpu.dot_dimension_numbers<[1], [0], [0], [1], [0, 0, 1, 1], [], []>} : vector<2x32xf32>, vector<32x32xf32>, vector<2x32xf32> -> vector<2x32xf32>
    %c0_3 = arith.constant 0 : index
    %c0_4 = arith.constant 0 : index
    %3 = vector.load %arg3[%c0_3, %c0_4] : memref<1x32xf32, #tpu.memory_space<vmem>>, vector<1x32xf32>
    %4 = vector.broadcast %3 : vector<1x32xf32> to vector<2x32xf32>
    %5 = arith.addf %2, %4 : vector<2x32xf32>
    %cst_5 = arith.constant 0.000000e+00 : f32
    %6 = vector.broadcast %cst_5 : f32 to vector<2x32xf32>
    %7 = arith.maximumf %5, %6 : vector<2x32xf32>
    %c0_6 = arith.constant 0 : index
    %c0_7 = arith.constant 0 : index
    %8 = vector.load %arg4[%c0_6, %c0_7] : memref<1x32xf32, #tpu.memory_space<vmem>>, vector<1x32xf32>
    "tpu.trace_start"() <{level = 10 : i32, message = "oh,bh->ob"}> : () -> ()
    %cst_8 = arith.constant dense<0.000000e+00> : vector<1x2xf32>
    %9 = tpu.matmul %8, %7, %cst_8 {dimension_numbers = #tpu.dot_dimension_numbers<[1], [1], [0], [0], [0, 0, 1, 0], [], []>} : vector<1x32xf32>, vector<2x32xf32>, vector<1x2xf32> -> vector<1x2xf32>
    "tpu.trace_stop"() : () -> ()
    %c0_9 = arith.constant 0 : index
    %c0_10 = arith.constant 0 : index
    %10 = vector.load %arg5[%c0_9, %c0_10] : memref<1x1xf32, #tpu.memory_space<vmem>>, vector<1x1xf32>
    %11 = vector.broadcast %10 : vector<1x1xf32> to vector<1x2xf32>
    %12 = arith.addf %9, %11 : vector<1x2xf32>
    %13 = arith.negf %12 : vector<1x2xf32>
    %14 = math.exp %13 : vector<1x2xf32>
    %cst_11 = arith.constant 1.000000e+00 : f32
    %15 = vector.broadcast %cst_11 : f32 to vector<1x2xf32>
    %16 = arith.addf %15, %14 : vector<1x2xf32>
    %17 = arith.divf %15, %16 : vector<1x2xf32>
    %18 = vector.shape_cast %17 : vector<1x2xf32> to vector<1x1x2xf32>
    %c0_12 = arith.constant 0 : index
    %c0_13 = arith.constant 0 : index
    %c0_14 = arith.constant 0 : index
    %19 = vector.load %arg6[%c0_12, %c0_13, %c0_14] : memref<1x1x2xf32, #tpu.memory_space<vmem>>, vector<1x1x2xf32>
    tpu.vector_store %arg6[%c0_12, %c0_13, %c0_14], %18 {strides = array<i32>} : memref<1x1x2xf32, #tpu.memory_space<vmem>>, vector<1x1x2xf32>,
    return
  }
  func.func @transform_0(%arg0: i32) -> (i32, i32) {
    %c0_i32 = arith.constant 0 : i32
    %c0_i32_0 = arith.constant 0 : i32
    return %arg0, %c0_i32 : i32, i32
  }
  func.func @transform_1(%arg0: i32) -> (i32, i32) {
    %c0_i32 = arith.constant 0 : i32
    %c0_i32_0 = arith.constant 0 : i32
    %c0_i32_1 = arith.constant 0 : i32
    return %c0_i32, %c0_i32_0 : i32, i32
  }
  func.func @transform_2(%arg0: i32) -> (i32, i32) {
    %c0_i32 = arith.constant 0 : i32
    %c0_i32_0 = arith.constant 0 : i32
    %c0_i32_1 = arith.constant 0 : i32
    return %c0_i32, %c0_i32_0 : i32, i32
  }
  func.func @transform_3(%arg0: i32) -> (i32, i32) {
    %c0_i32 = arith.constant 0 : i32
    %c0_i32_0 = arith.constant 0 : i32
    %c0_i32_1 = arith.constant 0 : i32
    return %c0_i32, %c0_i32_0 : i32, i32
  }
  func.func @transform_4(%arg0: i32) -> (i32, i32) {
    %c0_i32 = arith.constant 0 : i32
    %c0_i32_0 = arith.constant 0 : i32
    %c0_i32_1 = arith.constant 0 : i32
    return %c0_i32, %c0_i32_0 : i32, i32
  }
  func.func @transform_5(%arg0: i32) -> (i32, i32, i32) {
    %c0_i32 = arith.constant 0 : i32
    %c0_i32_0 = arith.constant 0 : i32
    %c0_i32_1 = arith.constant 0 : i32
    return %arg0, %c0_i32, %c0_i32_0 : i32, i32, i32
  }
}

</mosaic_0001>

<llo_original>
// kernel: tpu_custom_call.1
$region0: #{tpu_custom_call.1}
  #allocation0 [shape = 'u32[]', space=smem, size = 0x4, offset = 0x4, fixed_abs, tag = 'smem constant byte address 0x4 - core index']
  #allocation1 [shape = 'u32[144,128]{1,0:T(1,128)}', space=vmem, size = 0x12000, scoped, tag = 'internal scratch']
  #allocation2 [shape = 'f32[1,1]{1,0:T(1,128)S(1)}', space=vmem, size = 0x200, scoped, tag = 'scoped memory for tpu_custom_call.1']
  %s0 = inlined_call_operand.vmem [shape: f32[2,32], index: 0, kind: input, shape index: {}]
  %s1 = inlined_call_operand.hbm [shape: f32[32,32], index: 1, kind: input, shape index: {}]
  %s2 = inlined_call_operand.vmem [shape: f32[1,32], index: 2, kind: input, shape index: {}]
  %s3 = inlined_call_operand.vmem [shape: f32[1,32], index: 3, kind: input, shape index: {}]
  %s4 = inlined_call_operand.<no memory space> [shape: f32[1,1], index: 4, kind: input, shape index: {}]
  %s5 = inlined_call_operand.hbm [shape: f32[1,1,2], index: 5, kind: output, shape index: {}]
  %s6 = sld [smem:[#allocation0]]
  $region34: #{tpu_custom_call.1} parent=0
    _
  %s8 = ssub.s32 1, %s6
  %s9 = scalar_select 0, %s8, %s6
  %v10 = vstv %s4
  %11 = vst [vmem:[#allocation2] sm:$0x1] %v10
  $region1: #{tpu_custom_call.1} parent=0
    #allocation3 [shape = 'u8[16384]{0}', space=vmem, size = 0x4000, scoped, tag = 'input window, operand 1, single buffered']
    #allocation4 [shape = 's32[1]{0}', space=sflag, size = 0x4, scoped, tag = 'scoped memory for tpu_custom_call.1']
    #allocation5 [shape = 's32[1]{0}', space=sflag, size = 0x4, scoped, tag = 'scoped memory for tpu_custom_call.1']
    #allocation6 [shape = 'u8[512]{0}', space=vmem, size = 0x400, scoped, tag = 'output window, operand 0, single buffered']
    %12 = vsyncpa [#allocation4], 0
    %13 = vsyncpa [#allocation5], 0
    // Predicated region
    $region2: #{tpu_custom_call.1} parent=1 // pred_check
      _
    $region3: #{tpu_custom_call.1} parent=1 // pred_check_branch
      %15 = sbr.rel (0) target = $region5
    $region4: #{tpu_custom_call.1} parent=1 // pred_region
      _
    $region5: #{tpu_custom_call.1} parent=1 // pred_fallthru
      _
    // Predicated region
    $region6: #{tpu_custom_call.1} parent=1 // pred_check
      _
    $region7: #{tpu_custom_call.1} parent=1 // pred_check_branch
      %17 = sbr.rel (0) target = $region9
    $region8: #{tpu_custom_call.1} parent=1 // pred_region
      %s19 = ssub.s32 512, 512
      %20 = vsyncadd [#allocation4], %s19
      %s21 = sshll.u32 [#allocation3], 4
      %s22 = int_to_ptr.vmem [resolvable:$true] %s21
      %27 = dma.hbm_to_vmem [thread:$0]  %s1, 512, %s22, [#allocation4], 128, 128, 8
    $region9: #{tpu_custom_call.1} parent=1 // pred_fallthru
      _
    // Predicated region
    $region10: #{tpu_custom_call.1} parent=1 // pred_check
      _
    $region11: #{tpu_custom_call.1} parent=1 // pred_check_branch
      %29 = sbr.rel (0) target = $region13
    $region12: #{tpu_custom_call.1} parent=1 // pred_region
      _
    $region13: #{tpu_custom_call.1} parent=1 // pred_fallthru
      _
    // Predicated region
    $region14: #{tpu_custom_call.1} parent=1 // pred_check
      _
    $region15: #{tpu_custom_call.1} parent=1 // pred_check_branch
      %31 = sbr.rel (0) target = $region17
    $region16: #{tpu_custom_call.1} parent=1 // pred_region
      _
    $region17: #{tpu_custom_call.1} parent=1 // pred_fallthru
      _
    // Predicated region
    $region18: #{tpu_custom_call.1} parent=1 // pred_check
      _
    $region19: #{tpu_custom_call.1} parent=1 // pred_check_branch
      %33 = sbr.rel (0) target = $region21
    $region20: #{tpu_custom_call.1} parent=1 // pred_region
      _
    $region21: #{tpu_custom_call.1} parent=1 // pred_fallthru
      _
    // Predicated region
    $region22: #{tpu_custom_call.1} parent=1 // pred_check
      _
    $region23: #{tpu_custom_call.1} parent=1 // pred_check_branch
      %35 = sbr.rel (0) target = $region25
    $region24: #{tpu_custom_call.1} parent=1 // pred_region
      %36 = dma.done [#allocation4], 512
    $region25: #{tpu_custom_call.1} parent=1 // pred_fallthru
      _
    %v37 = vld [vmem:[%s0] sm:$0x3]
    %v38 = vld [vmem:[#allocation3] sm:$0xff]
    %v39 = vld [vmem:[#allocation3 + $0x8] sm:$0xff]
    %v40 = vld [vmem:[#allocation3 + $0x10] sm:$0xff]
    %v41 = vld [vmem:[#allocation3 + $0x18] sm:$0xff]
    %v42 = vld [vmem:[%s2] sm:$0x1]
    %v44 = vlaneseq
    %v45 = vshrl.u32 %v44, 7
    %v46 = vsub.s32 0, %v45
    %v47 = vrot.slane %v42, %v46
    %vm49 = vcmask 261120
    %v51 = vsel %vm49, %v37, 0
    %53 = vmatprep.subr.mxu0 0.0
    %54 = vmatpush1.msra.mxu0 %v38
    %55 = vmatprep.subr.mxu0 0.0
    %56 = vmatpush1.msra.mxu0 %v39
    %57 = vmatprep.subr.mxu0 0.0
    %58 = vmatpush1.msra.mxu0 %v40
    %59 = vmatprep.subr.mxu0 0.0
    %60 = vmatpush1.msra.mxu0 %v41
    %61 = vmatprep.subr.mxu0 0.0
    %62 = vmatpush1.msra.mxu0 0.0
    %63 = vmatprep.subr.mxu0 0.0
    %64 = vmatpush1.msra.mxu0 0.0
    %65 = vmatprep.subr.mxu0 0.0
    %66 = vmatpush1.msra.mxu0 0.0
    %67 = vmatprep.subr.mxu0 0.0
    %68 = vmatpush1.msra.mxu0 0.0
    %69 = vmatprep.subr.mxu0 0.0
    %70 = vmatpush1.msra.mxu0 0.0
    %71 = vmatprep.subr.mxu0 0.0
    %72 = vmatpush1.msra.mxu0 0.0
    %73 = vmatprep.subr.mxu0 0.0
    %74 = vmatpush1.msra.mxu0 0.0
    %75 = vmatprep.subr.mxu0 0.0
    %76 = vmatpush1.msra.mxu0 0.0
    %77 = vmatprep.subr.mxu0 0.0
    %78 = vmatpush1.msra.mxu0 0.0
    %79 = vmatprep.subr.mxu0 0.0
    %80 = vmatpush1.msra.mxu0 0.0
    %81 = vmatprep.subr.mxu0 0.0
    %82 = vmatpush1.msra.mxu0 0.0
    %83 = vmatprep.subr.mxu0 0.0
    %84 = vmatpush1.msra.mxu0 0.0
    %85 = vmatprep.subr.mxu0 0.0
    %86 = vmatpush1.msra.mxu0 0.0
    %87 = vmatprep.subr.mxu0 0.0
    %88 = vmatpush1.msra.mxu0 0.0
    %89 = vmatprep.subr.mxu0 0.0
    %90 = vmatpush1.msra.mxu0 0.0
    %91 = vmatprep.subr.mxu0 0.0
    %92 = vmatpush1.msra.mxu0 0.0
    %93 = vmatprep.subr.mxu0 0.0
    %94 = vmatpush1.msra.mxu0 0.0
    %95 = vmatprep.subr.mxu0 0.0
    %96 = vmatpush1.msra.mxu0 0.0
    %97 = vmatprep.subr.mxu0 0.0
    %98 = vmatpush1.msra.mxu0 0.0
    %99 = vmatprep.subr.mxu0 0.0
    %100 = vmatpush1.msra.mxu0 0.0
    %101 = vmatprep.subr.mxu0 0.0
    %102 = vmatpush1.msra.mxu0 0.0
    %103 = vmatprep.subr.mxu0 0.0
    %104 = vmatpush1.msra.mxu0 0.0
    %105 = vmatprep.subr.mxu0 0.0
    %106 = vmatpush1.msra.mxu0 0.0
    %107 = vmatprep.subr.mxu0 0.0
    %108 = vmatpush1.msra.mxu0 0.0
    %109 = vmatprep.subr.mxu0 0.0
    %110 = vmatpush1.msra.mxu0 0.0
    %111 = vmatprep.subr.mxu0 0.0
    %112 = vmatpush1.msra.mxu0 0.0
    %113 = vmatprep.subr.mxu0 0.0
    %114 = vmatpush1.msra.mxu0 0.0
    %115 = vmatprep.subr.mxu0 0.0
    %116 = vmatpush1.msra.mxu0 0.0
    %117 = vmatprep.mubr.f32.mxu0 0.0
    %118 = vmatmul.mubr.f32.gmra.mrb[0].mxu0 %v51
    %v119 = vpop.f32.mrb[0].mxu0
    %v120 = vadd.f32 %v47, %v119
    %v121 = vpop.f32.mrb[0].mxu0
    %122 = vdwg.mxu0
    %v123 = vmax.f32 %v120, 0.0
    %v124 = vld [vmem:[%s3] sm:$0x1]
    %v125 = vld [vmem:[#allocation2] sm:$0x1]
    %127 = vset.pattern.permute.xlu0 0
    %128 = vperm.xlu0 %127, %v125
    %v129 = vpop.permute.xlu0 %128
    %v131 = vlaneseq
    %v132 = vshrl.u32 %v131, 7
    %v133 = vsub.s32 0, %v132
    %v134 = vrot.slane %v129, %v133
    %v136 = vsel %vm49, %v124, 0
    %v139 = vsel %vm49, %v123, 0
    %141 = vmatprep.subr.mxu0 0.0
    %142 = vmatpush1.xpose.msra.mxu0 %v139
    %143 = vmatprep.subr.mxu0 0.0
    %144 = vmatpush1.xpose.msra.mxu0 0.0
    %145 = vmatprep.subr.mxu0 0.0
    %146 = vmatpush1.xpose.msra.mxu0 0.0
    %147 = vmatprep.subr.mxu0 0.0
    %148 = vmatpush1.xpose.msra.mxu0 0.0
    %149 = vmatprep.subr.mxu0 0.0
    %150 = vmatpush1.xpose.msra.mxu0 0.0
    %151 = vmatprep.subr.mxu0 0.0
    %152 = vmatpush1.xpose.msra.mxu0 0.0
    %153 = vmatprep.subr.mxu0 0.0
    %154 = vmatpush1.xpose.msra.mxu0 0.0
    %155 = vmatprep.subr.mxu0 0.0
    %156 = vmatpush1.xpose.msra.mxu0 0.0
    %157 = vmatprep.subr.mxu0 0.0
    %158 = vmatpush1.xpose.msra.mxu0 0.0
    %159 = vmatprep.subr.mxu0 0.0
    %160 = vmatpush1.xpose.msra.mxu0 0.0
    %161 = vmatprep.subr.mxu0 0.0
    %162 = vmatpush1.xpose.msra.mxu0 0.0
    %163 = vmatprep.subr.mxu0 0.0
    %164 = vmatpush1.xpose.msra.mxu0 0.0
    %165 = vmatprep.subr.mxu0 0.0
    %166 = vmatpush1.xpose.msra.mxu0 0.0
    %167 = vmatprep.subr.mxu0 0.0
    %168 = vmatpush1.xpose.msra.mxu0 0.0
    %169 = vmatprep.subr.mxu0 0.0
    %170 = vmatpush1.xpose.msra.mxu0 0.0
    %171 = vmatprep.subr.mxu0 0.0
    %172 = vmatpush1.xpose.msra.mxu0 0.0
    %173 = vmatprep.subr.mxu0 0.0
    %174 = vmatpush1.xpose.msra.mxu0 0.0
    %175 = vmatprep.subr.mxu0 0.0
    %176 = vmatpush1.xpose.msra.mxu0 0.0
    %177 = vmatprep.subr.mxu0 0.0
    %178 = vmatpush1.xpose.msra.mxu0 0.0
    %179 = vmatprep.subr.mxu0 0.0
    %180 = vmatpush1.xpose.msra.mxu0 0.0
    %181 = vmatprep.subr.mxu0 0.0
    %182 = vmatpush1.xpose.msra.mxu0 0.0
    %183 = vmatprep.subr.mxu0 0.0
    %184 = vmatpush1.xpose.msra.mxu0 0.0
    %185 = vmatprep.subr.mxu0 0.0
    %186 = vmatpush1.xpose.msra.mxu0 0.0
    %187 = vmatprep.subr.mxu0 0.0
    %188 = vmatpush1.xpose.msra.mxu0 0.0
    %189 = vmatprep.subr.mxu0 0.0
    %190 = vmatpush1.xpose.msra.mxu0 0.0
    %191 = vmatprep.subr.mxu0 0.0
    %192 = vmatpush1.xpose.msra.mxu0 0.0
    %193 = vmatprep.subr.mxu0 0.0
    %194 = vmatpush1.xpose.msra.mxu0 0.0
    %195 = vmatprep.subr.mxu0 0.0
    %196 = vmatpush1.xpose.msra.mxu0 0.0
    %197 = vmatprep.subr.mxu0 0.0
    %198 = vmatpush1.xpose.msra.mxu0 0.0
    %199 = vmatprep.subr.mxu0 0.0
    %200 = vmatpush1.xpose.msra.mxu0 0.0
    %201 = vmatprep.subr.mxu0 0.0
    %202 = vmatpush1.xpose.msra.mxu0 0.0
    %203 = vmatprep.subr.mxu0 0.0
    %204 = vmatpush1.xpose.msra.mxu0 0.0
    %205 = vmatprep.mubr.f32.mxu0 0.0
    %206 = vmatmul.mubr.f32.gmra.mrb[0].mxu0 %v136
    %v207 = vpop.f32.mrb[0].mxu0
    %v208 = vadd.f32 %v134, %v207
    %v209 = vpop.f32.mrb[0].mxu0
    %210 = vdwg.mxu0
    %v211 = vxor.u32 %v208, 2147483648
    %v212 = vmul.f32 %v211, 1.442695
    %v213 = vpow.pop %v212
    %v214 = vadd.f32 %v213, 1.0
    %v215 = vrcp.pop %v214
    %v216 = vmul.f32 1.0, %v215
    %vm217 = vcmask 8192
    %218 = vst.msk [vmem:[#allocation6] sm:$0x1] %vm217, %v216
    // Predicated region
    $region26: #{tpu_custom_call.1} parent=1 // pred_check
      _
    $region27: #{tpu_custom_call.1} parent=1 // pred_check_branch
      %220 = sbr.rel (0) target = $region29
    $region28: #{tpu_custom_call.1} parent=1 // pred_region
      %s222 = ssub.s32 16, 16
      %223 = vsyncadd [#allocation5], %s222
      %s225 = sshll.u32 [#allocation6], 4
      %s226 = int_to_ptr.vmem [resolvable:$true] %s225
      %228 = dma.vmem_to_hbm [thread:$0]  %s226, 16, %s5, [#allocation5]
    $region29: #{tpu_custom_call.1} parent=1 // pred_fallthru
      _
    // Predicated region
    $region30: #{tpu_custom_call.1} parent=1 // pred_check
      _
    $region31: #{tpu_custom_call.1} parent=1 // pred_check_branch
      %230 = sbr.rel (0) target = $region33
    $region32: #{tpu_custom_call.1} parent=1 // pred_region
      %231 = dma.done [#allocation5], 16
    $region33: #{tpu_custom_call.1} parent=1 // pred_fallthru
      _
    %232 = vsyncpa [#allocation4], 1
    %233 = vsyncpa [#allocation5], 1

</llo_original>
